<compile_context>
chip_gen: v7x
topology: tpu7x:2x2x1
jax: 0.10.0
libtpu: 0.0.40
codegen_flags: <defaults>
</compile_context>

<pallas_src>
import math
from functools import partial

import jax
import jax.numpy as jnp
from jax import lax
from jax.experimental import pallas as pl
from jax.experimental.pallas import tpu as pltpu

# ----------------------------------------------------------------------------
# Scaled-down configuration (structure mirrors SynthesizerTrn, sizes are small)
# ----------------------------------------------------------------------------
B = 2
T_Y = 16        # acoustic frames (w2v / mel length)
T_X = 8         # text length
W2V_DIM = 64    # stands in for 1024-dim w2v features
MEL_DIM = 16    # stands in for 80-bin mel (StyleEncoder input)
GIN = 32        # stands in for gin_channels=256
VOCAB = 40      # stands in for n_vocab=178
INTER = 32      # inter_channels
HIDDEN = 32     # hidden_channels
N_HEADS = 4
SEG = 8         # stands in for rand-slice segment_size=60

ENC_P_LAYERS = 3
ENC_P_KERNEL = 9
ENC_Q_WN_LAYERS = 16
W2V_WN_LAYERS = 8
FLOW_N_FLOWS = 4
FLOW_N_LAYERS = 3
FLOW_KERNEL = 5
DP_KERNEL = 3
DP_N_FLOWS = 4
NUM_BINS = 10
TAIL_BOUND = 5.0
LRELU_SLOPE = 0.1

PP_UP_INIT = 32
PP_RES_KERNELS = [3, 5, 7]
PP_RES_DILATIONS = [[1, 3, 5], [1, 3, 5], [1, 3, 5]]
PP_UP_RATES = [2, 2]
PP_UP_KERNELS = [4, 4]

F32 = jnp.float32
BF16 = jnp.bfloat16

# ----------------------------------------------------------------------------
# Pallas kernels
# ----------------------------------------------------------------------------
def _conv1x1_kernel(x_ref, w_ref, b_ref, o_ref):
    """1x1 channels-last conv for one batch element (w is bf16 in HBM)."""
    o_ref[0] = jnp.dot(x_ref[0].astype(BF16), w_ref[0],
                       preferred_element_type=jnp.float32) + b_ref[...]


def _conv_cl_kernel(x_ref, w_ref, b_ref, o_ref, xp_ref, *, K, dil, pad, T_out):
    """Channels-last Conv1d for one batch element.

    x_ref: (1, T, Cin) f32; w_ref: (K, Cin, Cout) bf16; b_ref: (1, Cout) f32.
    Zero padding is built in a VMEM scratch (halo rows zeroed, interior = x);
    each tap is a plain sublane slice of the scratch — no pad matmul, no HBM
    padded copies.
    """
    T = x_ref.shape[1]
    Cin = x_ref.shape[2]
    if pad > 0:
        xp_ref[:pad, :] = jnp.zeros((pad, Cin), jnp.float32)
        xp_ref[pad + T:, :] = jnp.zeros((pad, Cin), jnp.float32)
    xp_ref[pad:pad + T, :] = x_ref[0]
    acc = jnp.zeros((T_out, o_ref.shape[-1]), jnp.float32)
    for kk in range(K):
        acc = acc + jnp.dot(
            xp_ref[kk * dil: kk * dil + T_out, :].astype(BF16),
            w_ref[kk],
            preferred_element_type=jnp.float32)
    o_ref[0] = acc + b_ref[...]


@partial(jax.jit, static_argnames=("dil", "pad"))
def conv1d_cl(x, w, b, *, dil=1, pad=0):
    """PyTorch-semantics Conv1d in channels-last layout.

    x: (B, T, Cin) f32;  w: (K, Cin, Cout) (stored bf16);  b: (Cout,) or None.
    """
    Bx, T, Cin = x.shape
    K, _, Cout = w.shape
    T_out = T + 2 * pad - dil * (K - 1)
    bvec = (b if b is not None else jnp.zeros((Cout,), F32)).reshape(1, Cout)
    if K * Cin < 8:
        # degenerate contraction (e.g. Conv1d(1, C, 1)) — plain JAX glue
        xp = jnp.pad(x, ((0, 0), (pad, pad), (0, 0))) if pad else x
        cols = jnp.concatenate(
            [xp[:, kk * dil: kk * dil + T_out, :] for kk in range(K)], axis=-1)
        return cols @ w.reshape(K * Cin, Cout).astype(F32) + bvec[None]
    w16 = w.astype(BF16)
    if K == 1 and pad == 0:
        kern = _conv1x1_kernel
        scratch = []
    else:
        kern = partial(_conv_cl_kernel, K=K, dil=dil, pad=pad, T_out=T_out)
        scratch = [pltpu.VMEM((T + 2 * pad, Cin), jnp.float32)]
    # TODO(synk): add a time-tile grid axis + vmem_limit_bytes at production T.
    return pl.pallas_call(
        kern,
        grid=(Bx,),
        in_specs=[pl.BlockSpec((1, T, Cin), lambda i: (i, 0, 0)),
                  pl.BlockSpec((K, Cin, Cout), lambda i: (0, 0, 0)),
                  pl.BlockSpec((1, Cout), lambda i: (0, 0))],
        out_specs=pl.BlockSpec((1, T_out, Cout), lambda i: (i, 0, 0)),
        out_shape=jax.ShapeDtypeStruct((Bx, T_out, Cout), F32),
        scratch_shapes=scratch,
        compiler_params=pltpu.CompilerParams(dimension_semantics=("parallel",)),
    )(x, w16, bvec)


def conv_cl(x, p, dil=1, pad=0):
    return conv1d_cl(x, p['w'], p['b'], dil=dil, pad=pad)


# --- fused WaveNet (WN) stack: one pallas_call for all layers, batch folded ---
def _wn_stack_kernel(x0_ref, mask_ref, gct_ref, gcs_ref, wint_ref, wins_ref,
                     wres_ref, wskip_ref, bres_ref, bskip_ref,
                     out_ref, xst_ref, *, K, pad, n_layers, n_batch):
    """grid=(n_layers,).  The padded running state lives in a (B, T+2*pad, H)
    VMEM scratch (halos zeroed once at l==0); the skip accumulator is the
    resident output block.  Each layer's weights are DMA'd once and reused for
    every batch element (static batch loop)."""
    l = pl.program_id(0)
    T = x0_ref.shape[1]
    H = x0_ref.shape[2]

    @pl.when(l == 0)
    def _init():
        xst_ref[...] = jnp.zeros_like(xst_ref)          # zero halos once
        xst_ref[:, pad:pad + T, :] = x0_ref[...]        # interior = input state
        out_ref[...] = jnp.zeros_like(out_ref)

    mask = mask_ref[...]                                # (B, T, 1)

    for b in range(n_batch):                            # static: weight reuse x B
        # dilated conv (dilation_rate == 1), tanh/sigmoid halves from split
        # bf16 weights; taps are plain sublane slices of the padded scratch.
        acc_t = jnp.zeros((T, H), jnp.float32)
        acc_s = jnp.zeros((T, H), jnp.float32)
        for kk in range(K):
            xs = xst_ref[b, kk:kk + T, :].astype(BF16)
            acc_t = acc_t + jnp.dot(xs, wint_ref[0, kk],
                                    preferred_element_type=jnp.float32)
            acc_s = acc_s + jnp.dot(xs, wins_ref[0, kk],
                                    preferred_element_type=jnp.float32)
        acts = jnp.tanh(acc_t + gct_ref[0, b]) * jax.nn.sigmoid(acc_s + gcs_ref[0, b])
        a16 = acts.astype(BF16)
        skip = jnp.dot(a16, wskip_ref[0],
                       preferred_element_type=jnp.float32) + bskip_ref[0]
        out_ref[b] = out_ref[b] + skip                  # skip accumulation

        @pl.when(l < n_layers - 1)                      # last-layer res weight is 0
        def _res():
            res = jnp.dot(a16, wres_ref[0],
                          preferred_element_type=jnp.float32) + bres_ref[0]
            xst_ref[b, pad:pad + T, :] = (xst_ref[b, pad:pad + T, :] + res) * mask[b]

    @pl.when(l == n_layers - 1)
    def _fin():
        out_ref[...] = out_ref[...] * mask


@partial(jax.jit, static_argnames=("k", "n_layers"))
def wn_apply(p, x, mask, g_vec, *, k, n_layers):
    """x: (B, T, H) channels-last, mask: (B, T, 1), g_vec: (B, GIN)."""
    Bx, T, H = x.shape
    # per-layer global conditioning (tiny matmuls, T==1) — plain JAX as advised
    gc_t = jnp.einsum('bg,lgh->lbh', g_vec, p['cond_wt']) + p['cond_bt'][:, None, :]
    gc_s = jnp.einsum('bg,lgh->lbh', g_vec, p['cond_ws']) + p['cond_bs'][:, None, :]
    gc_t = gc_t[:, :, None, :]                          # (L, B, 1, H)
    gc_s = gc_s[:, :, None, :]
    pad = (k - 1) // 2
    # TODO(synk): for v7x megacore, add a batch/time-tile "parallel" axis; at prod
    # dims (H multiple of 128) fuse w_in_t|w_in_s and res|skip into 2H-wide dots.
    return pl.pallas_call(
        partial(_wn_stack_kernel, K=k, pad=pad, n_layers=n_layers, n_batch=Bx),
        grid=(n_layers,),
        in_specs=[
            pl.BlockSpec((Bx, T, H), lambda l: (0, 0, 0)),        # x0 (fetched once)
            pl.BlockSpec((Bx, T, 1), lambda l: (0, 0, 0)),        # mask
            pl.BlockSpec((1, Bx, 1, H), lambda l: (l, 0, 0, 0)),  # g cond tanh
            pl.BlockSpec((1, Bx, 1, H), lambda l: (l, 0, 0, 0)),  # g cond sigmoid
            pl.BlockSpec((1, k, H, H), lambda l: (l, 0, 0, 0)),   # in-conv (tanh)
            pl.BlockSpec((1, k, H, H), lambda l: (l, 0, 0, 0)),   # in-conv (sigm)
            pl.BlockSpec((1, H, H), lambda l: (l, 0, 0)),         # res 1x1
            pl.BlockSpec((1, H, H), lambda l: (l, 0, 0)),         # skip 1x1
            pl.BlockSpec((1, 1, H), lambda l: (l, 0, 0)),         # res bias
            pl.BlockSpec((1, 1, H), lambda l: (l, 0, 0)),         # skip bias
        ],
        out_specs=pl.BlockSpec((Bx, T, H), lambda l: (0, 0, 0)),
        out_shape=jax.ShapeDtypeStruct((Bx, T, H), F32),
        scratch_shapes=[pltpu.VMEM((Bx, T + 2 * pad, H), jnp.float32)],
        compiler_params=pltpu.CompilerParams(
            dimension_semantics=("arbitrary",)),
    )(x, mask, gc_t, gc_s, p['w_in_t'], p['w_in_s'],
      p['w_res'], p['w_skip'], p['b_res'], p['b_skip'])


# --- attention ----------------------------------------------------------------
def _attn_kernel(len_ref, qkv_ref, o_ref, *, n_heads):
    """grid=(B,).  qkv_ref: (1, T, 3C) lane-dense (q columns pre-scaled);
    the sequence mask is built in-kernel from the scalar-prefetched lengths;
    output is a single lane-dense (T, C) block."""
    b = pl.program_id(0)
    L = len_ref[b]
    T = qkv_ref.shape[1]
    C = qkv_ref.shape[2] // 3
    dh = C // n_heads
    qkv = qkv_ref[0]                                    # (T, 3C) f32
    row = lax.broadcasted_iota(jnp.int32, (T, T), 0)
    col = lax.broadcasted_iota(jnp.int32, (T, T), 1)
    valid = (row < L) & (col < L)
    outs = []
    # TODO(synk): flash-style KV tiling (grid over T//tkv) for production T on v7x.
    for h in range(n_heads):
        q = qkv[:, h * dh:(h + 1) * dh].astype(BF16)
        k = qkv[:, C + h * dh:C + (h + 1) * dh].astype(BF16)
        v = qkv[:, 2 * C + h * dh:2 * C + (h + 1) * dh].astype(BF16)
        s = lax.dot_general(q, k, (((1,), (1,)), ((), ())),
                            preferred_element_type=jnp.float32)
        s = jnp.where(valid, s, -1e4)
        s = s - jnp.max(s, axis=-1, keepdims=True)
        p = jnp.exp(s)
        p = p * pl.reciprocal(jnp.sum(p, axis=-1, keepdims=True), approx=True)
        outs.append(jnp.dot(p.astype(BF16), v, preferred_element_type=jnp.float32))
    o_ref[0] = jnp.concatenate(outs, axis=-1)


@partial(jax.jit, static_argnames=("n_heads",))
def pallas_attention(qkv, lengths, *, n_heads):
    """qkv: (B, T, 3C) fused projection output; lengths: (B,) int32."""
    Bx, T, C3 = qkv.shape
    C = C3 // 3
    return pl.pallas_call(
        partial(_attn_kernel, n_heads=n_heads),
        grid_spec=pltpu.PrefetchScalarGridSpec(
            num_scalar_prefetch=1,
            grid=(Bx,),
            in_specs=[pl.BlockSpec((1, T, C3), lambda b, lens: (b, 0, 0))],
            out_specs=pl.BlockSpec((1, T, C), lambda b, lens: (b, 0, 0))),
        out_shape=jax.ShapeDtypeStruct((Bx, T, C), F32),
        compiler_params=pltpu.CompilerParams(dimension_semantics=("parallel",)),
    )(lengths.astype(jnp.int32), qkv)


# --- fused MAS neg_cent (all four terms) and batched matmul --------------------
def _neg_cent_kernel(u_ref, v_ref, w_ref, o_ref):
    # o = u @ v^T + w   (u = [-0.5 z_p^2 | z_p], v = [s_p_sq_r | m_p*s_p_sq_r])
    o_ref[0] = lax.dot_general(u_ref[0], v_ref[0], (((1,), (1,)), ((), ())),
                               preferred_element_type=jnp.float32) + w_ref[0]


@jax.jit
def pallas_neg_cent(u, v, nc14):
    Bx, Ty, C2 = u.shape
    Tx = v.shape[1]
    return pl.pallas_call(
        _neg_cent_kernel,
        grid=(Bx,),
        in_specs=[pl.BlockSpec((1, Ty, C2), lambda i: (i, 0, 0)),
                  pl.BlockSpec((1, Tx, C2), lambda i: (i, 0, 0)),
                  pl.BlockSpec((1, 1, Tx), lambda i: (i, 0, 0))],
        out_specs=pl.BlockSpec((1, Ty, Tx), lambda i: (i, 0, 0)),
        out_shape=jax.ShapeDtypeStruct((Bx, Ty, Tx), F32),
        compiler_params=pltpu.CompilerParams(dimension_semantics=("parallel",)),
    )(u, v, nc14)


def _bmm_kernel(a_ref, b_ref, o_ref):
    o_ref[0] = jnp.dot(a_ref[0], b_ref[0], preferred_element_type=jnp.float32)


@jax.jit
def pallas_bmm(a, b):
    """(B, M, K) @ (B, K, N) -> (B, M, N); kept f32 (KL-loss precision)."""
    Bx, M, K = a.shape
    N = b.shape[2]
    return pl.pallas_call(
        _bmm_kernel,
        grid=(Bx,),
        in_specs=[pl.BlockSpec((1, M, K), lambda i: (i, 0, 0)),
                  pl.BlockSpec((1, K, N), lambda i: (i, 0, 0))],
        out_specs=pl.BlockSpec((1, M, N), lambda i: (i, 0, 0)),
        out_shape=jax.ShapeDtypeStruct((Bx, M, N), F32),
        compiler_params=pltpu.CompilerParams(dimension_semantics=("parallel",)),
    )(a.astype(F32), b.astype(F32))


# ----------------------------------------------------------------------------
# Parameter construction (deterministic, synthetic)
# ----------------------------------------------------------------------------
class ParamInit:
    def __init__(self, seed=0):
        self.key = jax.random.PRNGKey(seed)
        self.count = 0

    def normal(self, shape, std=0.05):
        self.count += 1
        k = jax.random.fold_in(self.key, self.count)
        return (std * jax.random.normal(k, shape)).astype(F32)


def convp(pi, cin, cout, k=1, bias=True, std=0.05, zero=False):
    """Conv1d params, kernel layout (K, Cin, Cout); weights stored bf16 in HBM."""
    w = jnp.zeros((k, cin, cout), F32) if zero else pi.normal((k, cin, cout), std)
    return {'w': w.astype(BF16), 'b': (jnp.zeros((cout,), F32) if bias else None)}


def lin_p(pi, cin, cout, std=0.05):
    return {'w': pi.normal((cin, cout), std), 'b': jnp.zeros((cout,), F32)}


def ln_p(c):
    return {'g': jnp.ones((c,), F32), 'b': jnp.zeros((c,), F32)}


def init_wn(pi, hidden, k, n_layers, gin):
    L = n_layers
    w_res = pi.normal((L, hidden, hidden))
    w_res = w_res.at[L - 1].set(0.0)        # last layer produces skip only
    return {
        'w_in_t': pi.normal((L, k, hidden, hidden)).astype(BF16),
        'w_in_s': pi.normal((L, k, hidden, hidden)).astype(BF16),
        'w_res': w_res.astype(BF16),
        'w_skip': pi.normal((L, hidden, hidden)).astype(BF16),
        'b_res': jnp.zeros((L, 1, hidden), F32),
        'b_skip': jnp.zeros((L, 1, hidden), F32),
        'cond_wt': pi.normal((L, gin, hidden)),
        'cond_ws': pi.normal((L, gin, hidden)),
        'cond_bt': jnp.zeros((L, hidden), F32),
        'cond_bs': jnp.zeros((L, hidden), F32),
    }


def init_encoder(pi, hidden, filter_ch, n_layers, k, n_heads):
    dh = hidden // n_heads
    scale = 1.0 / math.sqrt(dh)
    layers = []
    for _ in range(n_layers):
        qw = pi.normal((hidden, hidden)) * scale      # softmax scale folded into q
        kw = pi.normal((hidden, hidden))
        vw = pi.normal((hidden, hidden))
        layers.append({
            'qkv': {'w': jnp.concatenate([qw, kw, vw], axis=1)[None].astype(BF16),
                    'b': jnp.zeros((3 * hidden,), F32)},
            'o': convp(pi, hidden, hidden),
            'ln1': ln_p(hidden),
            'c1': convp(pi, hidden, filter_ch, k),
            'c2': convp(pi, filter_ch, hidden, k),
            'ln2': ln_p(hidden),
        })
    return layers


# ----------------------------------------------------------------------------
# Plain-JAX glue
# ----------------------------------------------------------------------------
def sequence_mask(lengths, max_len):
    return (jnp.arange(max_len)[None, :] < lengths[:, None])


def leaky_relu(x, slope):
    return jax.nn.leaky_relu(x, slope)


def layer_norm_cl(x, p, eps=1e-5):
    """LayerNorm over the channel (last) dim (VITS modules.LayerNorm)."""
    mean = jnp.mean(x, axis=-1, keepdims=True)
    var = jnp.mean(jnp.square(x - mean), axis=-1, keepdims=True)
    return (x - mean) * lax.rsqrt(var + eps) * p['g'] + p['b']


def depthwise_conv_cl(x, w, b, dil, pad):
    """Depthwise Conv1d (groups == channels). x: (B,T,C), w: (C,K)."""
    Bx, T, C = x.shape
    K = w.shape[1]
    xp = jnp.pad(x, ((0, 0), (pad, pad), (0, 0)))
    out = jnp.zeros((Bx, T, C), F32)
    for kk in range(K):
        out = out + xp[:, kk * dil: kk * dil + T, :] * w[:, kk][None, None, :]
    return out + b[None, None, :]


# ----------------------------------------------------------------------------
# Transformer encoder (attentions.Encoder)
# ----------------------------------------------------------------------------
# TODO(synk): relative-position attention (window_size=4) of
# attentions.MultiHeadAttention is not implemented; plain scaled-dot attention.
def mha_forward(lp, x, lengths, n_heads):
    qkv = conv_cl(x, lp['qkv'])                       # fused QKV 1x1 (q pre-scaled)
    out = pallas_attention(qkv, lengths, n_heads=n_heads)
    return conv_cl(out, lp['o'])


def ffn_forward(lp, x, mask, pad):
    y = conv_cl(x * mask, lp['c1'], pad=pad)
    y = jax.nn.relu(y)
    y = conv_cl(y * mask, lp['c2'], pad=pad)
    return y * mask


def encoder_forward(layers, x, x_mask, lengths, n_heads, k):
    x = x * x_mask
    pad = k // 2
    for lp in layers:
        y = mha_forward(lp, x, lengths, n_heads)                 # dropout omitted
        x = layer_norm_cl(x + y, lp['ln1'])
        y = ffn_forward(lp, x, x_mask, pad)
        x = layer_norm_cl(x + y, lp['ln2'])
    return x * x_mask


# ----------------------------------------------------------------------------
# TextEncoder (enc_p)
# ----------------------------------------------------------------------------
def init_text_encoder(pi):
    return {
        'emb': pi.normal((VOCAB, INTER), INTER ** -0.5),
        'cond': lin_p(pi, GIN, INTER),
        'enc1': init_encoder(pi, INTER, INTER * 4, ENC_P_LAYERS, ENC_P_KERNEL, N_HEADS),
        'enc2': init_encoder(pi, INTER, INTER * 4, ENC_P_LAYERS, ENC_P_KERNEL, N_HEADS),
        'proj': convp(pi, INTER, 2 * INTER),
    }


def text_encoder_forward(p, tokens, x_lengths, g_vec):
    x = p['emb'][tokens] * math.sqrt(INTER)                       # (B, T, C)
    x_mask = sequence_mask(x_lengths, x.shape[1])[:, :, None].astype(F32)
    x = encoder_forward(p['enc1'], x * x_mask, x_mask, x_lengths, N_HEADS, ENC_P_KERNEL)
    x = x + (g_vec @ p['cond']['w'] + p['cond']['b'])[:, None, :]
    x = encoder_forward(p['enc2'], x, x_mask, x_lengths, N_HEADS, ENC_P_KERNEL)
    stats = conv_cl(x, p['proj']) * x_mask
    m, logs = stats[..., :INTER], stats[..., INTER:]
    return x, m, logs, x_mask


# ----------------------------------------------------------------------------
# PosteriorEncoder (enc_q) and W2VDecoder
# ----------------------------------------------------------------------------
def init_posterior(pi):
    return {'pre': convp(pi, W2V_DIM, HIDDEN),
            'wn': init_wn(pi, HIDDEN, 5, ENC_Q_WN_LAYERS, GIN),
            'proj': convp(pi, HIDDEN, 2 * INTER)}


def posterior_forward(p, y_cl, y_mask, g_vec, key):
    x = conv_cl(y_cl, p['pre']) * y_mask
    x = wn_apply(p['wn'], x, y_mask, g_vec, k=5, n_layers=ENC_Q_WN_LAYERS)
    stats = conv_cl(x, p['proj']) * y_mask
    m, logs = stats[..., :INTER], stats[..., INTER:]
    z = (m + jax.random.normal(key, m.shape, F32) * jnp.exp(logs)) * y_mask
    return z, m, logs


def init_w2v_decoder(pi):
    hid = 2 * INTER
    return {'pre': convp(pi, INTER, hid),
            'wn': init_wn(pi, hid, 5, W2V_WN_LAYERS, GIN),
            'proj': convp(pi, hid, W2V_DIM)}


def w2v_decoder_forward(p, z, y_mask, g_vec):
    x = conv_cl(z * y_mask, p['pre']) * y_mask
    x = wn_apply(p['wn'], x, y_mask, g_vec, k=5, n_layers=W2V_WN_LAYERS)
    return conv_cl(x, p['proj']) * y_mask


# ----------------------------------------------------------------------------
# StyleEncoder (emb_g)
# ----------------------------------------------------------------------------
# TODO(synk): original StyleEncoder(in_dim=80, hidden=256, out=256) definition is
# not provided in the source; stand-in = conv + masked mean-pool + linear.
def init_style(pi):
    return {'spec': convp(pi, MEL_DIM, GIN), 'fc': lin_p(pi, GIN, GIN)}


def style_forward(p, mel_cl, mask):
    h = jax.nn.relu(conv_cl(mel_cl, p['spec'])) * mask
    pooled = jnp.sum(h, axis=1) / jnp.maximum(jnp.sum(mask, axis=1), 1.0)
    return pooled @ p['fc']['w'] + p['fc']['b']                   # (B, GIN)


# ----------------------------------------------------------------------------
# Flow (ResidualCouplingBlock_Transformer)
# ----------------------------------------------------------------------------
# TODO(synk): exact modules.ResidualCouplingLayer_Transformer_simple definition is
# not provided; coupling = pre(1x1) + g-add + small transformer + zero-init post,
# mean_only.
def init_coupling(pi):
    half = INTER // 2
    return {'pre': convp(pi, half, HIDDEN),
            'enc': init_encoder(pi, HIDDEN, HIDDEN * 2, FLOW_N_LAYERS,
                                FLOW_KERNEL, N_HEADS),
            'post': convp(pi, HIDDEN, half, zero=True)}


def coupling_forward(p, x, x_mask, lengths, g_hidden):
    half = INTER // 2
    x0, x1 = x[..., :half], x[..., half:]
    h = conv_cl(x0, p['pre']) * x_mask
    h = h + g_hidden[:, None, :]
    h = encoder_forward(p['enc'], h, x_mask, lengths, N_HEADS, FLOW_KERNEL)
    m = conv_cl(h, p['post']) * x_mask
    x1 = (m + x1) * x_mask
    return jnp.concatenate([x0, x1], axis=-1)


def init_flow(pi):
    return {'cond1': lin_p(pi, GIN, 4 * HIDDEN),
            'cond2': lin_p(pi, 4 * HIDDEN, HIDDEN),
            'couplings': [init_coupling(pi) for _ in range(FLOW_N_FLOWS)]}


def flow_forward(p, x, x_mask, lengths, g_vec):
    h = jax.nn.silu(g_vec @ p['cond1']['w'] + p['cond1']['b'])
    h = h @ p['cond2']['w'] + p['cond2']['b']                     # (B, HIDDEN)
    for i in range(FLOW_N_FLOWS):
        x = coupling_forward(p['couplings'][i], x, x_mask, lengths, h)
        x = jnp.flip(x, axis=-1)                                  # modules.Flip
    return x


# ----------------------------------------------------------------------------
# StochasticDurationPredictor (dp)
# ----------------------------------------------------------------------------
def init_dds(pi, ch, k, n_layers):
    return [{'sep_w': pi.normal((ch, k)), 'sep_b': jnp.zeros((ch,), F32),
             'pw': convp(pi, ch, ch), 'ln1': ln_p(ch), 'ln2': ln_p(ch)}
            for _ in range(n_layers)]


def dds_forward(layers, x, mask, k, g=None):
    if g is not None:
        x = x + g
    for i, lp in enumerate(layers):
        dil = k ** i
        pad = (k * dil - dil) // 2
        y = depthwise_conv_cl(x * mask, lp['sep_w'], lp['sep_b'], dil, pad)
        y = layer_norm_cl(y, lp['ln1'])
        y = jax.nn.gelu(y, approximate=False)
        y = conv_cl(y, lp['pw'])
        y = layer_norm_cl(y, lp['ln2'])
        y = jax.nn.gelu(y, approximate=False)          # dropout omitted
        x = x + y
    return x * mask


def ew_affine_forward(p, x, x_mask):
    y = (p['m'][None, None, :] + jnp.exp(p['logs'])[None, None, :] * x) * x_mask
    logdet = jnp.sum(p['logs'][None, None, :] * jnp.ones_like(x) * x_mask, axis=(1, 2))
    return y, logdet


def log_flow(x, x_mask):
    y = jnp.log(jnp.maximum(x, 1e-5)) * x_mask
    logdet = jnp.sum(-y, axis=(1, 2))
    return y, logdet


def rational_quadratic_spline(inputs, uw, uh, ud, tail_bound=TAIL_BOUND,
                              min_bin_width=1e-3, min_bin_height=1e-3,
                              min_derivative=1e-3):
    """Forward unconstrained rational-quadratic spline with linear tails."""
    num_bins = uw.shape[-1]
    inside = (inputs >= -tail_bound) & (inputs <= tail_bound)
    constant = math.log(math.exp(1.0 - min_derivative) - 1.0)
    ud = jnp.pad(ud, [(0, 0)] * (ud.ndim - 1) + [(1, 1)], constant_values=constant)

    widths = jax.nn.softmax(uw, axis=-1)
    widths = min_bin_width + (1 - min_bin_width * num_bins) * widths
    cumw = jnp.cumsum(widths, axis=-1)
    cumw = jnp.pad(cumw, [(0, 0)] * (cumw.ndim - 1) + [(1, 0)])
    cumw = 2 * tail_bound * cumw - tail_bound
    cumw = cumw.at[..., 0].set(-tail_bound).at[..., -1].set(tail_bound)
    widths = cumw[..., 1:] - cumw[..., :-1]

    derivs = min_derivative + jax.nn.softplus(ud)

    heights = jax.nn.softmax(uh, axis=-1)
    heights = min_bin_height + (1 - min_bin_height * num_bins) * heights
    cumh = jnp.cumsum(heights, axis=-1)
    cumh = jnp.pad(cumh, [(0, 0)] * (cumh.ndim - 1) + [(1, 0)])
    cumh = 2 * tail_bound * cumh - tail_bound
    cumh = cumh.at[..., 0].set(-tail_bound).at[..., -1].set(tail_bound)
    heights = cumh[..., 1:] - cumh[..., :-1]

    x = jnp.clip(inputs, -tail_bound, tail_bound)
    bin_idx = jnp.sum((x[..., None] >= cumw).astype(jnp.int32), axis=-1) - 1
    bin_idx = jnp.clip(bin_idx, 0, num_bins - 1)

    def gather(t):
        return jnp.take_along_axis(t, bin_idx[..., None], axis=-1)[..., 0]

    in_cw = gather(cumw)
    in_bw = gather(widths)
    in_ch = gather(cumh)
    delta = heights / widths
    in_delta = gather(delta)
    in_d = gather(derivs)
    in_dp1 = gather(derivs[..., 1:])
    in_h = gather(heights)

    theta = (x - in_cw) / in_bw
    theta_om = theta * (1 - theta)
    numer = in_h * (in_delta * theta ** 2 + in_d * theta_om)
    denom = in_delta + (in_d + in_dp1 - 2 * in_delta) * theta_om
    outputs = in_ch + numer / denom
    dnum = in_delta ** 2 * (in_dp1 * theta ** 2 + 2 * in_delta * theta_om
                            + in_d * (1 - theta) ** 2)
    logabsdet = jnp.log(dnum) - 2 * jnp.log(denom)

    outputs = jnp.where(inside, outputs, inputs)
    logabsdet = jnp.where(inside, logabsdet, 0.0)
    return outputs, logabsdet


def init_convflow(pi, filter_ch, k):
    return {'pre': convp(pi, 1, filter_ch),
            'dds': init_dds(pi, filter_ch, k, 3),
            'proj': convp(pi, filter_ch, 3 * NUM_BINS - 1, zero=True)}


def convflow_forward(p, x, x_mask, g, filter_ch, k):
    x0, x1 = x[..., :1], x[..., 1:]
    h = conv_cl(x0, p['pre'])
    h = dds_forward(p['dds'], h, x_mask, k, g=g)
    h = conv_cl(h, p['proj']) * x_mask                  # (B, T, 3*bins-1)
    uw = h[..., :NUM_BINS] / math.sqrt(filter_ch)
    uh = h[..., NUM_BINS:2 * NUM_BINS] / math.sqrt(filter_ch)
    ud = h[..., 2 * NUM_BINS:]
    x1n, logabsdet = rational_quadratic_spline(x1[..., 0], uw, uh, ud)
    x_out = jnp.concatenate([x0, x1n[..., None]], axis=-1) * x_mask
    logdet = jnp.sum(logabsdet * x_mask[..., 0], axis=1)
    return x_out, logdet


def init_sdp(pi):
    fc = INTER
    return {
        'pre': convp(pi, INTER, fc), 'proj': convp(pi, fc, fc),
        'convs': init_dds(pi, fc, DP_KERNEL, 3),
        'cond': lin_p(pi, GIN, fc),
        'post_pre': convp(pi, 1, fc), 'post_proj': convp(pi, fc, fc),
        'post_convs': init_dds(pi, fc, DP_KERNEL, 3),
        'flows_affine': {'m': jnp.zeros((2,), F32), 'logs': jnp.zeros((2,), F32)},
        'flows_cf': [init_convflow(pi, fc, DP_KERNEL) for _ in range(DP_N_FLOWS)],
        'post_flows_affine': {'m': jnp.zeros((2,), F32), 'logs': jnp.zeros((2,), F32)},
        'post_flows_cf': [init_convflow(pi, fc, DP_KERNEL) for _ in range(4)],
    }


def sdp_forward(p, x, x_mask, w, g_vec, key):
    fc = INTER
    x = conv_cl(x, p['pre'])
    x = x + (g_vec @ p['cond']['w'] + p['cond']['b'])[:, None, :]
    x = dds_forward(p['convs'], x, x_mask, DP_KERNEL)
    x = conv_cl(x, p['proj']) * x_mask

    h_w = conv_cl(w, p['post_pre'])
    h_w = dds_forward(p['post_convs'], h_w, x_mask, DP_KERNEL)
    h_w = conv_cl(h_w, p['post_proj']) * x_mask

    Bx, T, _ = w.shape
    e_q = jax.random.normal(key, (Bx, T, 2), F32) * x_mask
    z_q = e_q
    logdet_tot_q = jnp.zeros((Bx,), F32)
    gpost = x + h_w
    z_q, ld = ew_affine_forward(p['post_flows_affine'], z_q, x_mask)
    logdet_tot_q = logdet_tot_q + ld
    for cf in p['post_flows_cf']:
        z_q, ld = convflow_forward(cf, z_q, x_mask, gpost, fc, DP_KERNEL)
        logdet_tot_q = logdet_tot_q + ld
        z_q = jnp.flip(z_q, axis=-1)                    # Flip (logdet 0)

    z_u, z1 = z_q[..., :1], z_q[..., 1:]
    u = jax.nn.sigmoid(z_u) * x_mask
    z0 = (w - u) * x_mask
    logdet_tot_q = logdet_tot_q + jnp.sum(
        (jax.nn.log_sigmoid(z_u) + jax.nn.log_sigmoid(-z_u)) * x_mask, axis=(1, 2))
    logq = jnp.sum(-0.5 * (math.log(2 * math.pi) + e_q ** 2) * x_mask,
                   axis=(1, 2)) - logdet_tot_q

    logdet_tot = jnp.zeros((Bx,), F32)
    z0, ld = log_flow(z0, x_mask)
    logdet_tot = logdet_tot + ld
    z = jnp.concatenate([z0, z1], axis=-1)
    z, ld = ew_affine_forward(p['flows_affine'], z, x_mask)
    logdet_tot = logdet_tot + ld
    for cf in p['flows_cf']:
        z, ld = convflow_forward(cf, z, x_mask, x, fc, DP_KERNEL)
        logdet_tot = logdet_tot + ld
        z = jnp.flip(z, axis=-1)
    nll = jnp.sum(0.5 * (math.log(2 * math.pi) + z ** 2) * x_mask,
                  axis=(1, 2)) - logdet_tot
    return nll + logq


# ----------------------------------------------------------------------------
# PitchPredictor (pp)
# ----------------------------------------------------------------------------
def init_pp(pi):
    p = {'conv_pre': convp(pi, W2V_DIM, PP_UP_INIT, 7),
         'cond': lin_p(pi, GIN, PP_UP_INIT),
         'ups': [], 'resblocks': []}
    for i, (u, kk) in enumerate(zip(PP_UP_RATES, PP_UP_KERNELS)):
        cin = PP_UP_INIT // 2 ** i
        cout = PP_UP_INIT // 2 ** (i + 1)
        # ConvTranspose1d stored directly as its zero-stuffed Conv1d equivalent
        p['ups'].append({'w': pi.normal((kk, cin, cout), 0.01).astype(BF16),
                         'b': jnp.zeros((cout,), F32)})
    for i in range(len(PP_UP_RATES)):
        ch = PP_UP_INIT // 2 ** (i + 1)
        for kk, dd in zip(PP_RES_KERNELS, PP_RES_DILATIONS):
            p['resblocks'].append({
                'c1': [convp(pi, ch, ch, kk) for _ in dd],
                'c2': [convp(pi, ch, ch, kk) for _ in dd]})
    ch = PP_UP_INIT // 2 ** len(PP_UP_RATES)
    p['conv_post'] = convp(pi, ch, 1, 7, bias=False)
    return p


def resblock1_forward(rb, x, k, dils):
    for c1, c2, d in zip(rb['c1'], rb['c2'], dils):
        xt = leaky_relu(x, LRELU_SLOPE)
        xt = conv_cl(xt, c1, dil=d, pad=(k * d - d) // 2)
        xt = leaky_relu(xt, LRELU_SLOPE)
        xt = conv_cl(xt, c2, dil=1, pad=(k - 1) // 2)
        x = xt + x
    return x


def pp_forward(p, x, g_vec):
    x = conv_cl(x, p['conv_pre'], pad=3)
    x = x + (g_vec @ p['cond']['w'] + p['cond']['b'])[:, None, :]
    for i, (u, kk) in enumerate(zip(PP_UP_RATES, PP_UP_KERNELS)):
        x = leaky_relu(x, LRELU_SLOPE)
        Bx, T, C = x.shape
        x_up = jnp.zeros((Bx, (T - 1) * u + 1, C), F32).at[:, ::u, :].set(x)
        x = conv1d_cl(x_up, p['ups'][i]['w'], p['ups'][i]['b'],
                      dil=1, pad=kk - 1 - (kk - u) // 2)
        xs = None
        for j, (rk, rd) in enumerate(zip(PP_RES_KERNELS, PP_RES_DILATIONS)):
            out = resblock1_forward(p['resblocks'][i * len(PP_RES_KERNELS) + j],
                                    x, rk, rd)
            xs = out if xs is None else xs + out
        x = xs / len(PP_RES_KERNELS)
    x = leaky_relu(x, 0.01)
    x = conv_cl(x, p['conv_post'], pad=3)
    return x                                            # (B, T', 1)


# ----------------------------------------------------------------------------
# monotonic_align.maximum_path and commons.rand_slice_segments
# ----------------------------------------------------------------------------
# TODO(synk): maximum_path is an inherently sequential DP; implemented with
# lax.scan in plain JAX rather than Pallas.
def maximum_path(neg_cent, mask):
    Bx, t_y, t_x = neg_cent.shape
    NEG = -1e9
    v = jnp.where(mask > 0, neg_cent, NEG)
    t_ys = jnp.sum(mask[:, :, 0], axis=1).astype(jnp.int32)
    t_xs = jnp.sum(mask[:, 0, :], axis=1).astype(jnp.int32)

    def fwd(prev, v_row):
        shifted = jnp.concatenate(
            [jnp.full((Bx, 1), NEG, v.dtype), prev[:, :-1]], axis=1)
        cur = v_row + jnp.maximum(prev, shifted)
        return cur, cur

    q0 = jnp.concatenate(
        [jnp.zeros((Bx, 1), v.dtype), jnp.full((Bx, t_x - 1), NEG, v.dtype)], axis=1)
    _, Q = lax.scan(fwd, q0, jnp.moveaxis(v, 1, 0))
    Q = jnp.moveaxis(Q, 0, 1)                           # (B, t_y, t_x)

    def bwd(index, y):
        active = y < t_ys
        row = jnp.zeros((Bx, t_x), v.dtype)
        row = row.at[jnp.arange(Bx), index].set(jnp.where(active, 1.0, 0.0))
        qprev = jnp.where(y > 0, Q[:, jnp.maximum(y - 1, 0), :],
                          jnp.full((Bx, t_x), NEG, v.dtype))
        q_at = qprev[jnp.arange(Bx), index]
        q_at_m1 = qprev[jnp.arange(Bx), jnp.maximum(index - 1, 0)]
        move = (index > 0) & ((index == y) | (q_at < q_at_m1)) & active
        return jnp.where(move, index - 1, index), row

    ys = jnp.arange(t_y - 1, -1, -1)
    _, rows = lax.scan(bwd, t_xs - 1, ys)
    path = jnp.moveaxis(rows[::-1], 0, 1)               # (B, t_y, t_x)
    return path * mask


def rand_slice_segments_cl(x, x_lengths, segment_size, key):
    """x: (B, T, C) channels-last."""
    Bx, T, C = x.shape
    ids_str_max = x_lengths - segment_size + 1
    ids = (jax.random.uniform(key, (Bx,)) * ids_str_max).astype(jnp.int32)

    def sl(xb, i):
        return lax.dynamic_slice_in_dim(xb, i, segment_size, axis=0)

    return jax.vmap(sl)(x, ids), ids


# ----------------------------------------------------------------------------
# SynthesizerTrn
# ----------------------------------------------------------------------------
def init_synthesizer(pi):
    return {
        'emb_g': init_style(pi),
        'enc_p': init_text_encoder(pi),
        'enc_q': init_posterior(pi),
        'flow': init_flow(pi),
        'w2v_dec': init_w2v_decoder(pi),
        'dp': init_sdp(pi),
        'pp': init_pp(pi),
        'phoneme_classifier': convp(pi, INTER, VOCAB, bias=False),
    }


def synthesizer_forward(params, w2v, length, x_text, text_length, y_mel, rng):
    k_post, k_slice, k_sdp = jax.random.split(rng, 3)

    # channels-last inside the model; transpose once at the boundary
    w2v_cl = jnp.transpose(w2v, (0, 2, 1))                          # (B, Ty, 1024')
    mel_cl = jnp.transpose(y_mel, (0, 2, 1))                        # (B, Ty, 80')
    y_mask = sequence_mask(length, mel_cl.shape[1])[:, :, None].astype(F32)
    g_vec = style_forward(params['emb_g'], mel_cl, y_mask)          # (B, GIN)

    x, m_p, logs_p, x_mask = text_encoder_forward(params['enc_p'], x_text,
                                                  text_length, g_vec)
    z, m_q, logs_q = posterior_forward(params['enc_q'], w2v_cl, y_mask, g_vec, k_post)

    phoneme_predicted = conv_cl(z * y_mask, params['phoneme_classifier'])
    w2v_predicted = w2v_decoder_forward(params['w2v_dec'], z, y_mask, g_vec)
    z_p = flow_forward(params['flow'], z, y_mask, length, g_vec)

    w2v_slice, ids_slice = rand_slice_segments_cl(w2v_cl, length, SEG, k_slice)
    pitch_predicted = pp_forward(params['pp'], w2v_slice, g_vec)

    # --- monotonic alignment search (no-grad block in torch) ---
    # all four neg_cent terms fused into one Pallas kernel (NT matmul + row add);
    # operands demoted to bf16 (MAS only ranks alignment candidates).
    s_p_sq_r = jnp.exp(-2.0 * logs_p)
    nc14 = (jnp.sum(-0.5 * math.log(2 * math.pi) - logs_p, axis=-1)
            + jnp.sum(-0.5 * (m_p ** 2) * s_p_sq_r, axis=-1))[:, None, :]
    u = jnp.concatenate([-0.5 * z_p * z_p, z_p], axis=-1)           # (B,Ty,2C)
    v = jnp.concatenate([s_p_sq_r, m_p * s_p_sq_r], axis=-1)        # (B,Tx,2C)
    neg_cent = pallas_neg_cent(u.astype(BF16), v.astype(BF16), nc14)  # (B,Ty,Tx)
    attn_mask = y_mask * jnp.transpose(x_mask, (0, 2, 1))           # (B,Ty,Tx)
    attn = maximum_path(neg_cent, attn_mask)                        # (B,Ty,Tx)

    w_dur = jnp.sum(attn, axis=1)[..., None]                        # (B,Tx,1)
    l_length = sdp_forward(params['dp'], x, x_mask, w_dur, g_vec, k_sdp)
    l_length = l_length / jnp.sum(x_mask)

    # aligned m_p / logs_p fused in one bmm (kept f32 for KL precision)
    stats_p = jnp.concatenate([m_p, logs_p], axis=-1)               # (B,Tx,2C)
    aligned = pallas_bmm(attn, stats_p)                             # (B,Ty,2C)
    m_p_al, logs_p_al = aligned[..., :INTER], aligned[..., INTER:]

    to_ncl = lambda t: jnp.transpose(t, (0, 2, 1))
    return (to_ncl(w2v_predicted),
            (to_ncl(z), to_ncl(z_p), to_ncl(m_q), to_ncl(logs_q)),
            (to_ncl(m_p_al), to_ncl(logs_p_al)),
            to_ncl(y_mask), to_ncl(pitch_predicted), ids_slice,
            l_length, to_ncl(phoneme_predicted))


# ----------------------------------------------------------------------------
if __name__ == "__main__":
    key = jax.random.PRNGKey(0)
    k_w2v, k_mel, k_txt, k_fwd = jax.random.split(key, 4)

    w2v = jax.random.normal(k_w2v, (B, W2V_DIM, T_Y), F32)
    y_mel = jax.random.normal(k_mel, (B, MEL_DIM, T_Y), F32)
    length = jnp.array([T_Y, T_Y - 3], jnp.int32)
    x_text = jax.random.randint(k_txt, (B, T_X), 0, VOCAB)
    text_length = jnp.array([T_X, T_X - 2], jnp.int32)

    params = init_synthesizer(ParamInit(0))
    outs = synthesizer_forward(params, w2v, length, x_text, text_length, y_mel, k_fwd)
    jax.block_until_ready(outs)
    print("KERNEL_OK")
</pallas_src>

<mosaic_0001>
module attributes {stable_mosaic.version = 11 : i64} {
  func.func @_conv1x1_kernel(%arg0: i32, %arg1: memref<1x16x16xf32, #tpu.memory_space<vmem>>, %arg2: memref<1x16x32xbf16, #tpu.memory_space<vmem>>, %arg3: memref<1x32xf32, #tpu.memory_space<vmem>>, %arg4: memref<1x16x32xf32, #tpu.memory_space<vmem>>) attributes {dimension_semantics = [#tpu.dimension_semantics<parallel>], iteration_bounds = array<i64: 2>, scalar_prefetch = 0 : i64, scratch_operands = 0 : i64, tpu.core_type = #tpu.core_type<tc>, window_params = [{transform_indices = @transform_0, window_bounds = array<i64: 1, 16, 16>}, {pipeline_mode = #tpu.pipeline_mode<synchronous>, transform_indices = @transform_1, window_bounds = array<i64: 1, 16, 32>}, {pipeline_mode = #tpu.pipeline_mode<synchronous>, transform_indices = @transform_2, window_bounds = array<i64: 1, 32>}, {transform_indices = @transform_3, window_bounds = array<i64: 1, 16, 32>}]} {
    %c0 = arith.constant 0 : index
    %c0_0 = arith.constant 0 : index
    %c0_1 = arith.constant 0 : index
    %0 = vector.load %arg1[%c0, %c0_0, %c0_1] : memref<1x16x16xf32, #tpu.memory_space<vmem>>, vector<1x16x16xf32>
    %1 = vector.shape_cast %0 : vector<1x16x16xf32> to vector<16x16xf32>
    %2 = arith.truncf %1 : vector<16x16xf32> to vector<16x16xbf16>
    %c0_2 = arith.constant 0 : index
    %c0_3 = arith.constant 0 : index
    %c0_4 = arith.constant 0 : index
    %3 = vector.load %arg2[%c0_2, %c0_3, %c0_4] : memref<1x16x32xbf16, #tpu.memory_space<vmem>>, vector<1x16x32xbf16>
    %4 = vector.shape_cast %3 : vector<1x16x32xbf16> to vector<16x32xbf16>
    %cst = arith.constant dense<0.000000e+00> : vector<16x32xf32>
    %5 = tpu.matmul %2, %4, %cst {dimension_numbers = #tpu.dot_dimension_numbers<[1], [0], [0], [1], [0, 0, 1, 1], [], []>} : vector<16x16xbf16>, vector<16x32xbf16>, vector<16x32xf32> -> vector<16x32xf32>
    %c0_5 = arith.constant 0 : index
    %c0_6 = arith.constant 0 : index
    %6 = vector.load %arg3[%c0_5, %c0_6] : memref<1x32xf32, #tpu.memory_space<vmem>>, vector<1x32xf32>
    %7 = vector.broadcast %6 : vector<1x32xf32> to vector<16x32xf32>
    %8 = arith.addf %5, %7 : vector<16x32xf32>
    %c0_7 = arith.constant 0 : index
    %c0_8 = arith.constant 0 : index
    %c0_9 = arith.constant 0 : index
    %9 = vector.load %arg4[%c0_7, %c0_8, %c0_9] : memref<1x16x32xf32, #tpu.memory_space<vmem>>, vector<1x16x32xf32>
    %10 = vector.shape_cast %9 : vector<1x16x32xf32> to vector<16x32xf32>
    %11 = vector.shape_cast %8 : vector<16x32xf32> to vector<1x16x32xf32>
    tpu.vector_store %arg4[%c0_7, %c0_8, %c0_9], %11 {strides = array<i32>} : memref<1x16x32xf32, #tpu.memory_space<vmem>>, vector<1x16x32xf32>,
    return
  }
  func.func @transform_0(%arg0: i32) -> (i32, i32, i32) {
    %c0_i32 = arith.constant 0 : i32
    %c0_i32_0 = arith.constant 0 : i32
    %c0_i32_1 = arith.constant 0 : i32
    return %arg0, %c0_i32, %c0_i32_0 : i32, i32, i32
  }
  func.func @transform_1(%arg0: i32) -> (i32, i32, i32) {
    %c0_i32 = arith.constant 0 : i32
    %c0_i32_0 = arith.constant 0 : i32
    %c0_i32_1 = arith.constant 0 : i32
    %c0_i32_2 = arith.constant 0 : i32
    return %c0_i32, %c0_i32_0, %c0_i32_1 : i32, i32, i32
  }
  func.func @transform_2(%arg0: i32) -> (i32, i32) {
    %c0_i32 = arith.constant 0 : i32
    %c0_i32_0 = arith.constant 0 : i32
    %c0_i32_1 = arith.constant 0 : i32
    return %c0_i32, %c0_i32_0 : i32, i32
  }
  func.func @transform_3(%arg0: i32) -> (i32, i32, i32) {
    %c0_i32 = arith.constant 0 : i32
    %c0_i32_0 = arith.constant 0 : i32
    %c0_i32_1 = arith.constant 0 : i32
    return %arg0, %c0_i32, %c0_i32_0 : i32, i32, i32
  }
}

</mosaic_0001>

<llo_original>
// kernel: conv1d_cl.1
$region0: #{conv1d_cl.1}
  #allocation0 [shape = 'u32[]', space=smem, size = 0x4, offset = 0x4, fixed_abs, tag = 'smem constant byte address 0x4 - core index']
  #allocation1 [shape = 'u32[144,128]{1,0:T(1,128)}', space=vmem, size = 0x12000, scoped, tag = 'internal scratch']
  %s0 = inlined_call_operand.hbm [shape: f32[2,16,16], index: 0, kind: input, shape index: {}]
  %s1 = inlined_call_operand.hbm [shape: bf16[1,16,32], index: 1, kind: input, shape index: {}]
  %s2 = inlined_call_operand.vmem [shape: f32[1,32], index: 2, kind: input, shape index: {}]
  %s3 = inlined_call_operand.hbm [shape: f32[2,16,32], index: 3, kind: output, shape index: {}]
  %s4 = sld [smem:[#allocation0]]
  $region53: #{conv1d_cl.1} parent=0
    _
  %s6 = ssub.s32 1, %s4
  %s7 = scalar_select 0, %s6, %s4
  $region1: #{conv1d_cl.1} parent=0
    #allocation2 [shape = 'u8[16384]{0}', space=vmem, size = 0x4000, scoped, tag = 'input window, operand 0']
    #allocation3 [shape = 's32[2]{0}', space=sflag, size = 0x8, scoped, tag = 'scoped memory for conv1d_cl.1']
    #allocation4 [shape = 's32[2]{0}', space=sflag, size = 0x8, scoped, tag = 'scoped memory for conv1d_cl.1']
    #allocation5 [shape = 'u8[4096]{0}', space=vmem, size = 0x1000, scoped, tag = 'input window, operand 1, single buffered']
    #allocation6 [shape = 's32[1]{0}', space=sflag, size = 0x4, scoped, tag = 'scoped memory for conv1d_cl.1']
    #allocation7 [shape = 'u8[16384]{0}', space=vmem, size = 0x4000, scoped, tag = 'output window, operand 0']
    %8 = vsyncpa [#allocation3], 0
    %s9 = scalar_lea.sflag [#allocation3], 1
    %10 = vsyncpa %s9, 0
    %11 = vsyncpa [#allocation6], 0
    %12 = vsyncpa [#allocation4], 0
    %s13 = scalar_lea.sflag [#allocation4], 1
    %14 = vsyncpa %s13, 0
    loop: start=0, step=1, limit=4
    $region2: #{conv1d_cl.1} parent=1 // loop_pre_header
      _
    $region3: #{conv1d_cl.1} parent=1 // loop_header
      %s16 = sphi 0, %s20
      %p17 = scmp.ge.s32.totalorder %s16, 4
      %s26 = sphi 0, %s28
      %s29 = sphi 0, %s26
      %s30 = sphi 0, %s29
      %s46 = sphi 0, %s30
      %s50 = sphi 0, %s50
      %s52 = sphi 0, %s50
      %s53 = sphi 0, %s52
      %s67 = sphi 0, %s53
      %s71 = sphi 0, %s71
      %s73 = sphi 0, %s71
      %s74 = sphi 0, %s73
      %s88 = sphi 0, %s74
      %s94 = sphi 0, %s96
      %s97 = sphi 0, %s94
      %s98 = sphi 0, %s97
      %s114 = sphi 0, %s98
    $region4: #{conv1d_cl.1} parent=1 // loop_header_branch
      %19 = sbr.rel (%p17) target = $region8
    $region5: #{conv1d_cl.1} parent=1 // loop_body
      %s21 = ssub.s32 %s16, 1
      %s22 = ssub.s32 %s16, 2
      %s23 = sadd.s32 %s16, 1
      %s24 = ssub.s32 %s16, %s23
      %p25 = scmp.eq.s32.totalorder %s24, 0
      %s27 = sadd.s32 %s26, 1
      %s28 = scalar_select %p25, %s26, %s27
      %p31 = pneg %p25
      %p32 = scmp.eq.s32.totalorder %s16, 1
      %p33 = por %p31, %p32
      %p34 = scmp.ne.s32.totalorder %s26, %s29
      %p35 = scmp.eq.s32.totalorder %s16, 0
      %p36 = por %p34, %p35
      %p37 = scmp.ne.s32.totalorder %s26, %s29
      %p38 = scmp.eq.s32.totalorder %s21, 1
      %p39 = por %p37, %p38
      %p40 = scmp.ne.s32.totalorder %s29, %s30
      %p41 = scmp.eq.s32.totalorder %s21, 0
      %p42 = por %p40, %p41
      %p43 = scmp.ne.s32.totalorder %s29, %s30
      %p44 = scmp.eq.s32.totalorder %s22, 1
      %p45 = por %p43, %p44
      %p47 = scmp.ne.s32.totalorder %s30, %s46
      %p48 = scmp.eq.s32.totalorder %s22, 0
      %p49 = por %p47, %p48
      %s51 = sadd.s32 %s50, 1
      %p54 = scmp.eq.s32.totalorder %s16, 1
      %p55 = scmp.ne.s32.totalorder %s50, %s52
      %p56 = scmp.eq.s32.totalorder %s16, 0
      %p57 = por %p55, %p56
      %p58 = scmp.ne.s32.totalorder %s50, %s52
      %p59 = scmp.eq.s32.totalorder %s21, 1
      %p60 = por %p58, %p59
      %p61 = scmp.ne.s32.totalorder %s52, %s53
      %p62 = scmp.eq.s32.totalorder %s21, 0
      %p63 = por %p61, %p62
      %p64 = scmp.ne.s32.totalorder %s52, %s53
      %p65 = scmp.eq.s32.totalorder %s22, 1
      %p66 = por %p64, %p65
      %p68 = scmp.ne.s32.totalorder %s53, %s67
      %p69 = scmp.eq.s32.totalorder %s22, 0
      %p70 = por %p68, %p69
      %s72 = sadd.s32 %s71, 1
      %p75 = scmp.eq.s32.totalorder %s16, 1
      %p76 = scmp.ne.s32.totalorder %s71, %s73
      %p77 = scmp.eq.s32.totalorder %s16, 0
      %p78 = por %p76, %p77
      %p79 = scmp.ne.s32.totalorder %s71, %s73
      %p80 = scmp.eq.s32.totalorder %s21, 1
      %p81 = por %p79, %p80
      %p82 = scmp.ne.s32.totalorder %s73, %s74
      %p83 = scmp.eq.s32.totalorder %s21, 0
      %p84 = por %p82, %p83
      %p85 = scmp.ne.s32.totalorder %s73, %s74
      %p86 = scmp.eq.s32.totalorder %s22, 1
      %p87 = por %p85, %p86
      %p89 = scmp.ne.s32.totalorder %s74, %s88
      %p90 = scmp.eq.s32.totalorder %s22, 0
      %p91 = por %p89, %p90
      %s92 = ssub.s32 %s16, %s23
      %p93 = scmp.eq.s32.totalorder %s92, 0
      %s95 = sadd.s32 %s94, 1
      %s96 = scalar_select %p93, %s94, %s95
      %p99 = pneg %p93
      %p100 = scmp.eq.s32.totalorder %s16, 1
      %p101 = por %p99, %p100
      %p102 = scmp.ne.s32.totalorder %s94, %s97
      %p103 = scmp.eq.s32.totalorder %s16, 0
      %p104 = por %p102, %p103
      %p105 = scmp.ne.s32.totalorder %s94, %s97
      %p106 = scmp.eq.s32.totalorder %s21, 1
      %p107 = por %p105, %p106
      %p108 = scmp.ne.s32.totalorder %s97, %s98
      %p109 = scmp.eq.s32.totalorder %s21, 0
      %p110 = por %p108, %p109
      %p111 = scmp.ne.s32.totalorder %s97, %s98
      %p112 = scmp.eq.s32.totalorder %s22, 1
      %p113 = por %p111, %p112
      %p115 = scmp.ne.s32.totalorder %s98, %s114
      %p116 = scmp.eq.s32.totalorder %s22, 0
      %p117 = por %p115, %p116
      %p118 = scmp.le.s32.totalorder 1, %s16
      %p119 = scmp.lt.s32.totalorder %s16, 3
      %p120 = pnand %p118, %p119
      %p121 = pneg %p120
      // Predicated region
      $region9: #{conv1d_cl.1} parent=5 // pred_check
        _
      $region10: #{conv1d_cl.1} parent=5 // pred_check_branch
        %123 = sbr.rel (%p120) target = $region12
      $region11: #{conv1d_cl.1} parent=5 // pred_region
        %s124 = ssub.s32 %s16, 1
        // Predicated region
        $region13: #{conv1d_cl.1} parent=11 // pred_check
          %p125 = pneg %p63
        $region14: #{conv1d_cl.1} parent=11 // pred_check_branch
          %127 = sbr.rel (%p125) target = $region16
        $region15: #{conv1d_cl.1} parent=11 // pred_region
          %s129 = ssub.s32 128, 128
          %130 = vsyncadd [#allocation6], %s129
          %s131 = sshll.u32 [#allocation5], 4
          %s132 = int_to_ptr.vmem [resolvable:$true] %s131
          %137 = dma.hbm_to_vmem [thread:$0]  %s1, 128, %s132, [#allocation6], 64, 64, 4
        $region16: #{conv1d_cl.1} parent=11 // pred_fallthru
          _
        // Predicated region
        $region17: #{conv1d_cl.1} parent=11 // pred_check
          %p138 = pneg %p84
        $region18: #{conv1d_cl.1} parent=11 // pred_check_branch
          %140 = sbr.rel (%p138) target = $region20
        $region19: #{conv1d_cl.1} parent=11 // pred_region
          _
        $region20: #{conv1d_cl.1} parent=11 // pred_fallthru
          _
      $region12: #{conv1d_cl.1} parent=5 // pred_fallthru
        _
      %p141 = scmp.lt.s32.totalorder %s16, 2
      // Predicated region
      $region21: #{conv1d_cl.1} parent=5 // pred_check
        %p142 = pneg %p141
      $region22: #{conv1d_cl.1} parent=5 // pred_check_branch
        %144 = sbr.rel (%p142) target = $region24
      $region23: #{conv1d_cl.1} parent=5 // pred_region
        // Predicated region
        $region25: #{conv1d_cl.1} parent=23 // pred_check
          %p145 = pneg %p36
        $region26: #{conv1d_cl.1} parent=23 // pred_check_branch
          %147 = sbr.rel (%p145) target = $region28
        $region27: #{conv1d_cl.1} parent=23 // pred_region
          %s148 = sand.u32 %s26, 1
          %s149 = scalar_lea.sflag [#allocation3], %s148
          %s150 = sand.u32 %s26, 1
          %s151 = smul.addr %s150, 16
          %s152 = scalar_lea.vmem [#allocation2], %s151
          %s154 = ssub.s32 256, 256
          %155 = vsyncadd %s149, %s154
          %s156 = smul.addr %s16, 2
          %s157 = smul.addr %s156, 128
          %s158 = scalar_lea.hbm %s0, %s157
          %s159 = sshll.u32 %s152, 4
          %s160 = int_to_ptr.vmem [resolvable:$true] %s159
          %165 = dma.hbm_to_vmem [thread:$0]  %s158, 256, %s160, %s149, 128, 128, 8
        $region28: #{conv1d_cl.1} parent=23 // pred_fallthru
          _
      $region24: #{conv1d_cl.1} parent=5 // pred_fallthru
        _
      %p166 = scmp.le.s32.totalorder 1, %s16
      %p167 = scmp.lt.s32.totalorder %s16, 3
      %p168 = pnand %p166, %p167
      %p169 = pneg %p168
      // Predicated region
      $region29: #{conv1d_cl.1} parent=5 // pred_check
        _
      $region30: #{conv1d_cl.1} parent=5 // pred_check_branch
        %171 = sbr.rel (%p168) target = $region32
      $region31: #{conv1d_cl.1} parent=5 // pred_region
        %s172 = ssub.s32 %s16, 1
        %s173 = sand.u32 %s29, 1
        %s174 = scalar_lea.sflag [#allocation3], %s173
        %s175 = sand.u32 %s29, 1
        %s176 = smul.addr %s175, 16
        %s177 = scalar_lea.vmem [#allocation2], %s176
        // Predicated region
        $region33: #{conv1d_cl.1} parent=31 // pred_check
          %p178 = pneg %p42
        $region34: #{conv1d_cl.1} parent=31 // pred_check_branch
          %180 = sbr.rel (%p178) target = $region36
        $region35: #{conv1d_cl.1} parent=31 // pred_region
          %181 = dma.done %s174, 256
        $region36: #{conv1d_cl.1} parent=31 // pred_fallthru
          _
        // Predicated region
        $region37: #{conv1d_cl.1} parent=31 // pred_check
          %p182 = pneg %p63
        $region38: #{conv1d_cl.1} parent=31 // pred_check_branch
          %184 = sbr.rel (%p182) target = $region40
        $region39: #{conv1d_cl.1} parent=31 // pred_region
          %185 = dma.done [#allocation6], 128
        $region40: #{conv1d_cl.1} parent=31 // pred_fallthru
          _
        %s186 = sand.u32 %s29, 1
        %s187 = scalar_lea.sflag [#allocation3], %s186
        %s188 = sand.u32 %s29, 1
        %s189 = smul.addr %s188, 16
        %s190 = scalar_lea.vmem [#allocation2], %s189
        %p191 = pneg %p42
        %p192 = pneg %p39
        %p193 = pneg %p63
        %p194 = pneg %p60
        %p195 = pneg %p84
        %p196 = pneg %p81
        %p197 = pneg %p110
        %p198 = pneg %p107
        %s199 = sand.u32 %s97, 1
        %s200 = scalar_lea.sflag [#allocation4], %s199
        %s201 = sand.u32 %s97, 1
        %s202 = smul.addr %s201, 16
        %s203 = scalar_lea.vmem [#allocation7], %s202
        %v205 = vld [vmem:[%s177] sm:$0xff]
        %v206 = vld [vmem:[%s177 + $0x8] sm:$0xff]
        %v207 = vpack.c.bf16 %v206, %v205
        %v208 = vld [vmem:[#allocation5] sm:$0xf]
        %v209 = vld [vmem:[#allocation5 + $0x4] sm:$0xf]
        %v210 = vld [vmem:[%s2] sm:$0x1]
        %v212 = vlaneseq
        %v213 = vshrl.u32 %v212, 7
        %v214 = vsub.s32 0, %v213
        %v215 = vrot.slane %v210, %v214
        %v219 = vunpack.c.l.b16 %v208
        %v220 = vunpack.c.l.b16 %v209
        %v221 = vpack.c.b16 %v220, %v219
        %vm223 = vcmask 130048
        %v225 = vsel %vm223, %v207, 0
        %227 = vmatprep.subr.bf16.mxu0 0
        %228 = vmatpush1.bf16.msra.mxu0 %v221
        %229 = vmatprep.subr.bf16.mxu0 0
        %230 = vmatpush1.bf16.msra.mxu0 0
        %231 = vmatprep.subr.bf16.mxu0 0
        %232 = vmatpush1.bf16.msra.mxu0 0
        %233 = vmatprep.subr.bf16.mxu0 0
        %234 = vmatpush1.bf16.msra.mxu0 0
        %235 = vmatprep.subr.bf16.mxu0 0
        %236 = vmatpush1.bf16.msra.mxu0 0
        %237 = vmatprep.subr.bf16.mxu0 0
        %238 = vmatpush1.bf16.msra.mxu0 0
        %239 = vmatprep.subr.bf16.mxu0 0
        %240 = vmatpush1.bf16.msra.mxu0 0
        %241 = vmatprep.subr.bf16.mxu0 0
        %242 = vmatpush1.bf16.msra.mxu0 0
        %243 = vmatprep.subr.bf16.mxu0 0
        %244 = vmatpush1.bf16.msra.mxu0 0
        %245 = vmatprep.subr.bf16.mxu0 0
        %246 = vmatpush1.bf16.msra.mxu0 0
        %247 = vmatprep.subr.bf16.mxu0 0
        %248 = vmatpush1.bf16.msra.mxu0 0
        %249 = vmatprep.subr.bf16.mxu0 0
        %250 = vmatpush1.bf16.msra.mxu0 0
        %251 = vmatprep.subr.bf16.mxu0 0
        %252 = vmatpush1.bf16.msra.mxu0 0
        %253 = vmatprep.subr.bf16.mxu0 0
        %254 = vmatpush1.bf16.msra.mxu0 0
        %255 = vmatprep.subr.bf16.mxu0 0
        %256 = vmatpush1.bf16.msra.mxu0 0
        %257 = vmatprep.subr.bf16.mxu0 0
        %258 = vmatpush1.bf16.msra.mxu0 0
        %259 = vmatprep.mubr.bf16.mxu0 0
        %260 = vmatmul.mubr.bf16.gmra.mrb[0].mxu0 %v225
        %v261 = vpop.f32.mrb[0].mxu0
        %v262 = vadd.f32 %v215, %v261
        %v263 = vpop.f32.mrb[0].mxu0
        %v264 = vpop.f32.mrb[0].mxu0
        %v265 = vadd.f32 %v215, %v264
        %v266 = vpop.f32.mrb[0].mxu0
        %267 = vdwg.mxu0
        %vm268 = vcmask 261120
        %269 = vst.msk [vmem:[%s203] sm:$0xff] %vm268, %v262
        %270 = vst.msk [vmem:[%s203 + $0x8] sm:$0xff] %vm268, %v265
        %s271 = sand.u32 %s97, 1
        %s272 = scalar_lea.sflag [#allocation4], %s271
        %s273 = sand.u32 %s97, 1
        %s274 = smul.addr %s273, 16
        %s275 = scalar_lea.vmem [#allocation7], %s274
        // Predicated region
        $region41: #{conv1d_cl.1} parent=31 // pred_check
          %p276 = pneg %p107
        $region42: #{conv1d_cl.1} parent=31 // pred_check_branch
          %278 = sbr.rel (%p276) target = $region44
        $region43: #{conv1d_cl.1} parent=31 // pred_region
          %s280 = ssub.s32 256, 256
          %281 = vsyncadd %s272, %s280
          %s282 = smul.addr %s21, 2
          %s283 = smul.addr %s282, 128
          %s284 = scalar_lea.hbm %s3, %s283
          %s285 = sshll.u32 %s275, 4
          %s286 = int_to_ptr.vmem [resolvable:$true] %s285
          %291 = dma.vmem_to_hbm [thread:$0]  %s286, 256, %s284, %s272, 128, 128, 8
        $region44: #{conv1d_cl.1} parent=31 // pred_fallthru
          _
      $region32: #{conv1d_cl.1} parent=5 // pred_fallthru
        _
      %p292 = scmp.le.s32.totalorder 2, %s16
      // Predicated region
      $region45: #{conv1d_cl.1} parent=5 // pred_check
        %p293 = pneg %p292
      $region46: #{conv1d_cl.1} parent=5 // pred_check_branch
        %295 = sbr.rel (%p293) target = $region48
      $region47: #{conv1d_cl.1} parent=5 // pred_region
        %s296 = ssub.s32 %s16, 2
        // Predicated region
        $region49: #{conv1d_cl.1} parent=47 // pred_check
          %p297 = pneg %p113
        $region50: #{conv1d_cl.1} parent=47 // pred_check_branch
          %299 = sbr.rel (%p297) target = $region52
        $region51: #{conv1d_cl.1} parent=47 // pred_region
          %s300 = sand.u32 %s98, 1
          %s301 = scalar_lea.sflag [#allocation4], %s300
          %s302 = sand.u32 %s98, 1
          %s303 = smul.addr %s302, 16
          %s304 = scalar_lea.vmem [#allocation7], %s303
          %305 = dma.done %s301, 256
        $region52: #{conv1d_cl.1} parent=47 // pred_fallthru
          _
      $region48: #{conv1d_cl.1} parent=5 // pred_fallthru
        _
    $region6: #{conv1d_cl.1} parent=1 // loop_footer
      %s20 = sadd.s32 1, %s16
    $region7: #{conv1d_cl.1} parent=1 // loop_footer_branch
      %15 = sbr.rel target = $region3
    $region8: #{conv1d_cl.1} parent=1 // loop_exit
      _
    %306 = vsyncpa [#allocation3], 1
    %s307 = scalar_lea.sflag [#allocation3], 1
    %308 = vsyncpa %s307, 1
    %309 = vsyncpa [#allocation6], 1
    %310 = vsyncpa [#allocation4], 1
    %s311 = scalar_lea.sflag [#allocation4], 1
    %312 = vsyncpa %s311, 1

</llo_original>
